<compile_context>
chip_gen: v7x
topology: tpu7x:2x2x1
jax: 0.10.0
libtpu: 0.0.40
codegen_flags: <defaults>
</compile_context>

<pallas_src>
import functools

import jax
import jax.numpy as jnp
from jax.experimental import pallas as pl
from jax.experimental.pallas import tpu as pltpu

ALPHA = 0.25
GAMMA = 2.0
IGNORE_INDEX = 255.0

_LANES = 128
_MAX_TILE_ROWS = 8192      # (8192,128) f32 = 4 MiB/input block
_ACC_ROWS = 8              # vreg-shaped partial-sum accumulator
_VMEM_LIMIT_BYTES = 32 * 1024 * 1024   # 2 inputs x 2 bufs x 4 MiB fits easily


def _sublane_tile(dtype):
    """Minimum sublane tile for a dtype: f32->8, bf16/f16->16, int8/u8->32."""
    return {1: 32, 2: 16}.get(jnp.dtype(dtype).itemsize, 8)


def _num_core_splits():
    """2 only when one Pallas device fronts 2 TensorCores (v7x / megacore)."""
    try:
        kind = jax.devices()[0].device_kind.lower().replace(" ", "")
    except Exception:  # pragma: no cover - defensive
        return 1
    if "lite" in kind or "v5e" in kind or "v6e" in kind:
        return 1
    if "v7" in kind or "7x" in kind or "v4" in kind or "v5p" in kind:
        return 2
    return 1


def _focal_bce_reduce_kernel(preds_ref, labels_ref, sum_ref, cnt_ref, *,
                             steps_per_split, full_blocks, partial_rows):
    """Accumulate masked BCE-with-logits partial sums and mask counts.

    sum_ref / cnt_ref are (8, 128) output blocks resident across the
    streaming ("arbitrary") grid axis -> per-lane accumulators.
    """
    c = pl.program_id(0)   # core-split axis ("parallel")
    s = pl.program_id(1)   # streaming / reduction axis ("arbitrary")

    @pl.when(s == 0)
    def _():
        sum_ref[...] = jnp.zeros_like(sum_ref)
        cnt_ref[...] = jnp.zeros_like(cnt_ref)

    blk = c * steps_per_split + s   # logical block index (scalar unit)

    def accumulate(extra_valid=None):
        x = preds_ref[...].astype(jnp.float32)
        y = labels_ref[...]                      # native dtype
        keep = y != jnp.asarray(IGNORE_INDEX, dtype=y.dtype)
        if extra_valid is not None:
            keep = jnp.logical_and(keep, extra_valid)
        yf = y.astype(jnp.float32)
        # Numerically stable BCE with logits: max(x,0) - x*y + log1p(exp(-|x|))
        bce = jnp.maximum(x, 0.0) - x * yf + jnp.log1p(jnp.exp(-jnp.abs(x)))
        bce = jnp.where(keep, bce, 0.0)
        msk = keep.astype(jnp.float32)
        # Layout-preserving reshape (T,128)->(T//8,8,128); axis-0 sum lowers
        # to plain vreg adds (no relayout: minor (8,128) tiles are unchanged).
        sum_ref[...] += jnp.sum(bce.reshape(-1, _ACC_ROWS, _LANES), axis=0)
        cnt_ref[...] += jnp.sum(msk.reshape(-1, _ACC_ROWS, _LANES), axis=0)

    # Interior blocks: every element is real -> no bounds iota/compares.
    @pl.when(blk < full_blocks)
    def _():
        accumulate()

    if partial_rows:  # static: a trailing partially-filled block exists
        tile_rows = preds_ref.shape[0]

        @pl.when(blk == full_blocks)
        def _():
            row_ids = jax.lax.broadcasted_iota(
                jnp.int32, (tile_rows, _LANES), 0)
            accumulate(row_ids < partial_rows)
    # blk past the last real block (core-split overshoot; index_map clamps the
    # DMA): skip all compute, resident accumulators stay untouched.


def _bce_terms_xla(p, y):
    """Masked BCE-with-logits (sum, count) in plain JAX — tiny-tail path."""
    x = p.astype(jnp.float32)
    keep = y != jnp.asarray(IGNORE_INDEX, dtype=y.dtype)
    yf = y.astype(jnp.float32)
    bce = jnp.maximum(x, 0.0) - x * yf + jnp.log1p(jnp.exp(-jnp.abs(x)))
    return jnp.sum(jnp.where(keep, bce, 0.0)), jnp.sum(keep.astype(jnp.float32))


@jax.jit
def focal_loss(preds, labels):
    """Pallas-backed FocalLoss forward. preds/labels: same shape, any layout."""
    p_flat = preds.reshape(-1)
    l_flat = labels.reshape(-1)
    n = p_flat.shape[0]

    # Kernel handles the largest tile-aligned prefix; the (tiny) remainder is
    # reduced in XLA below — no full-array jnp.pad copy is ever taken.
    min_rows = max(_sublane_tile(p_flat.dtype), _sublane_tile(l_flat.dtype))
    rows_aligned = (n // _LANES) // min_rows * min_rows
    n_kernel = rows_aligned * _LANES

    bce_sum = jnp.float32(0.0)
    cnt = jnp.float32(0.0)

    if rows_aligned > 0:
        p2d = p_flat[:n_kernel].reshape(rows_aligned, _LANES)
        l2d = l_flat[:n_kernel].reshape(rows_aligned, _LANES)

        tile_rows = min(_MAX_TILE_ROWS, rows_aligned)
        full_blocks = rows_aligned // tile_rows
        partial_rows = rows_aligned % tile_rows
        num_blocks = full_blocks + (1 if partial_rows else 0)

        splits = _num_core_splits() if num_blocks >= 2 else 1
        steps_per_split = pl.cdiv(num_blocks, splits)
        last_block = num_blocks - 1

        def data_map(c, s):
            # Clamp so the DMA never walks off the array; overshoot blocks are
            # skipped entirely inside the kernel.
            return (jnp.minimum(c * steps_per_split + s, last_block), 0)

        kernel = functools.partial(
            _focal_bce_reduce_kernel,
            steps_per_split=steps_per_split,
            full_blocks=full_blocks,
            partial_rows=partial_rows,
        )

        part_sum, part_cnt = pl.pallas_call(
            kernel,
            out_shape=(
                jax.ShapeDtypeStruct((splits * _ACC_ROWS, _LANES),
                                     jnp.float32),
                jax.ShapeDtypeStruct((splits * _ACC_ROWS, _LANES),
                                     jnp.float32),
            ),
            grid_spec=pltpu.PrefetchScalarGridSpec(
                num_scalar_prefetch=0,
                grid=(splits, steps_per_split),
                in_specs=[
                    pl.BlockSpec((tile_rows, _LANES), data_map),
                    pl.BlockSpec((tile_rows, _LANES), data_map),
                ],
                out_specs=(
                    pl.BlockSpec((_ACC_ROWS, _LANES), lambda c, s: (c, 0)),
                    pl.BlockSpec((_ACC_ROWS, _LANES), lambda c, s: (c, 0)),
                ),
            ),
            compiler_params=pltpu.CompilerParams(
                dimension_semantics=("parallel", "arbitrary"),
                vmem_limit_bytes=_VMEM_LIMIT_BYTES,
            ),
        )(p2d, l2d)

        bce_sum = bce_sum + jnp.sum(part_sum)
        cnt = cnt + jnp.sum(part_cnt)

    if n_kernel < n:  # static decision; O(tail) XLA glue, no extra HBM pass
        t_sum, t_cnt = _bce_terms_xla(p_flat[n_kernel:], l_flat[n_kernel:])
        bce_sum = bce_sum + t_sum
        cnt = cnt + t_cnt

    # ---- scalar focal transform (matches the PyTorch forward) ----
    # TODO(synk): cnt == 0 (everything ignored) yields 0/0 -> NaN, same as the
    # reference implementation. cnt is exact in f32 only up to 2^24 per lane.
    mean_bce = bce_sum / cnt                      # BCEWithLogitsLoss (mean)
    logpt = -mean_bce
    pt = jnp.exp(logpt)
    loss = -((1.0 - pt) ** GAMMA) * ALPHA * logpt
    return loss


def _reference_focal_loss(preds, labels):
    """Pure-JAX reference for sanity checking."""
    p = preds.reshape(-1).astype(jnp.float32)
    y = labels.reshape(-1).astype(jnp.float32)
    mask = y != IGNORE_INDEX
    bce = jnp.maximum(p, 0.0) - p * y + jnp.log1p(jnp.exp(-jnp.abs(p)))
    mean_bce = jnp.sum(jnp.where(mask, bce, 0.0)) / jnp.sum(mask)
    logpt = -mean_bce
    pt = jnp.exp(logpt)
    return -((1.0 - pt) ** GAMMA) * ALPHA * logpt


if __name__ == "__main__":
    key = jax.random.PRNGKey(0)
    k1, k2, k3 = jax.random.split(key, 3)

    B, C, H, W = 2, 4, 16, 16  # NCHW, matches the PyTorch convention
    preds = jax.random.normal(k1, (B, C, H, W), dtype=jnp.float32)
    labels = jax.random.bernoulli(k2, p=0.5, shape=(B, C, H, W)).astype(
        jnp.float32
    )
    # Sprinkle some ignore_index entries into the labels.
    ignore_mask = jax.random.bernoulli(k3, p=0.1, shape=(B, C, H, W))
    labels = jnp.where(ignore_mask, IGNORE_INDEX, labels)

    loss = focal_loss(preds, labels)
    jax.block_until_ready(loss)

    ref = _reference_focal_loss(preds, labels)
    assert jnp.allclose(loss, ref, rtol=1e-5, atol=1e-6), (loss, ref)

    print("KERNEL_OK")
</pallas_src>

<mosaic_0001>
module attributes {stable_mosaic.version = 11 : i64} {
  func.func @_focal_bce_reduce_kernel(%arg0: i32, %arg1: i32, %arg2: memref<16x128xf32, #tpu.memory_space<vmem>>, %arg3: memref<16x128xf32, #tpu.memory_space<vmem>>, %arg4: memref<8x128xf32, #tpu.memory_space<vmem>>, %arg5: memref<8x128xf32, #tpu.memory_space<vmem>>) attributes {dimension_semantics = [#tpu.dimension_semantics<parallel>, #tpu.dimension_semantics<arbitrary>], iteration_bounds = array<i64: 1, 1>, scalar_prefetch = 0 : i64, scratch_operands = 0 : i64, tpu.core_type = #tpu.core_type<tc>, window_params = [{transform_indices = @transform_0, window_bounds = array<i64: 16, 128>}, {transform_indices = @transform_1, window_bounds = array<i64: 16, 128>}, {transform_indices = @transform_2, window_bounds = array<i64: 8, 128>}, {transform_indices = @transform_3, window_bounds = array<i64: 8, 128>}]} {
    %c0_i32 = arith.constant 0 : i32
    %0 = arith.cmpi eq, %arg1, %c0_i32 : i32
    %1 = arith.extui %0 : i1 to i32
    %c0_i32_0 = arith.constant 0 : i32
    %2 = arith.cmpi ne, %1, %c0_i32_0 : i32
    scf.if %2 {
      %cst = arith.constant 0.000000e+00 : f32
      %8 = vector.broadcast %cst : f32 to vector<8x128xf32>
      %c0 = arith.constant 0 : index
      %c0_3 = arith.constant 0 : index
      %9 = vector.load %arg4[%c0, %c0_3] : memref<8x128xf32, #tpu.memory_space<vmem>>, vector<8x128xf32>
      tpu.vector_store %arg4[%c0, %c0_3], %8 {strides = array<i32>} : memref<8x128xf32, #tpu.memory_space<vmem>>, vector<8x128xf32>,
      %cst_4 = arith.constant 0.000000e+00 : f32
      %10 = vector.broadcast %cst_4 : f32 to vector<8x128xf32>
      %c0_5 = arith.constant 0 : index
      %c0_6 = arith.constant 0 : index
      %11 = vector.load %arg5[%c0_5, %c0_6] : memref<8x128xf32, #tpu.memory_space<vmem>>, vector<8x128xf32>
      tpu.vector_store %arg5[%c0_5, %c0_6], %10 {strides = array<i32>} : memref<8x128xf32, #tpu.memory_space<vmem>>, vector<8x128xf32>,
    } else {
    }
    %c1_i32 = arith.constant 1 : i32
    %3 = arith.muli %arg0, %c1_i32 : i32
    %4 = arith.addi %3, %arg1 : i32
    %c1_i32_1 = arith.constant 1 : i32
    %5 = arith.cmpi slt, %4, %c1_i32_1 : i32
    %6 = arith.extui %5 : i1 to i32
    %c0_i32_2 = arith.constant 0 : i32
    %7 = arith.cmpi ne, %6, %c0_i32_2 : i32
    scf.if %7 {
      %c0 = arith.constant 0 : index
      %c0_3 = arith.constant 0 : index
      %8 = vector.load %arg2[%c0, %c0_3] : memref<16x128xf32, #tpu.memory_space<vmem>>, vector<16x128xf32>
      %c0_4 = arith.constant 0 : index
      %c0_5 = arith.constant 0 : index
      %9 = vector.load %arg3[%c0_4, %c0_5] : memref<16x128xf32, #tpu.memory_space<vmem>>, vector<16x128xf32>
      %cst = arith.constant 2.550000e+02 : f32
      %10 = vector.broadcast %cst : f32 to vector<16x128xf32>
      %11 = arith.cmpf one, %9, %10 : vector<16x128xf32>
      %cst_6 = arith.constant 0.000000e+00 : f32
      %12 = vector.broadcast %cst_6 : f32 to vector<16x128xf32>
      %13 = arith.maximumf %8, %12 : vector<16x128xf32>
      %14 = arith.mulf %8, %9 : vector<16x128xf32>
      %15 = arith.subf %13, %14 : vector<16x128xf32>
      %16 = math.absf %8 : vector<16x128xf32>
      %cst_7 = arith.constant 0.000000e+00 : f32
      %17 = vector.broadcast %cst_7 : f32 to vector<16x128xf32>
      %18 = arith.subf %17, %16 : vector<16x128xf32>
      %19 = math.exp %18 : vector<16x128xf32>
      %20 = math.log1p %19 : vector<16x128xf32>
      %21 = arith.addf %15, %20 : vector<16x128xf32>
      %cst_8 = arith.constant 0.000000e+00 : f32
      %22 = vector.broadcast %cst_8 : f32 to vector<16x128xf32>
      %23 = arith.select %11, %21, %22 : vector<16x128xi1>, vector<16x128xf32>
      %24 = arith.extui %11 : vector<16x128xi1> to vector<16x128xi32>
      %25 = arith.sitofp %24 : vector<16x128xi32> to vector<16x128xf32>
      %c0_9 = arith.constant 0 : index
      %c0_10 = arith.constant 0 : index
      %26 = vector.load %arg4[%c0_9, %c0_10] : memref<8x128xf32, #tpu.memory_space<vmem>>, vector<8x128xf32>
      %27 = vector.shape_cast %23 : vector<16x128xf32> to vector<2x8x128xf32>
      %cst_11 = arith.constant dense<0.000000e+00> : vector<8x128xf32>
      %28 = vector.multi_reduction <add>, %27, %cst_11 [0] : vector<2x8x128xf32> to vector<8x128xf32>
      %29 = arith.addf %26, %28 : vector<8x128xf32>
      %c0_12 = arith.constant 0 : index
      %c0_13 = arith.constant 0 : index
      %30 = vector.load %arg4[%c0_12, %c0_13] : memref<8x128xf32, #tpu.memory_space<vmem>>, vector<8x128xf32>
      tpu.vector_store %arg4[%c0_12, %c0_13], %29 {strides = array<i32>} : memref<8x128xf32, #tpu.memory_space<vmem>>, vector<8x128xf32>,
      %c0_14 = arith.constant 0 : index
      %c0_15 = arith.constant 0 : index
      %31 = vector.load %arg5[%c0_14, %c0_15] : memref<8x128xf32, #tpu.memory_space<vmem>>, vector<8x128xf32>
      %32 = vector.shape_cast %25 : vector<16x128xf32> to vector<2x8x128xf32>
      %cst_16 = arith.constant dense<0.000000e+00> : vector<8x128xf32>
      %33 = vector.multi_reduction <add>, %32, %cst_16 [0] : vector<2x8x128xf32> to vector<8x128xf32>
      %34 = arith.addf %31, %33 : vector<8x128xf32>
      %c0_17 = arith.constant 0 : index
      %c0_18 = arith.constant 0 : index
      %35 = vector.load %arg5[%c0_17, %c0_18] : memref<8x128xf32, #tpu.memory_space<vmem>>, vector<8x128xf32>
      tpu.vector_store %arg5[%c0_17, %c0_18], %34 {strides = array<i32>} : memref<8x128xf32, #tpu.memory_space<vmem>>, vector<8x128xf32>,
    } else {
    }
    return
  }
  func.func @transform_0(%arg0: i32, %arg1: i32) -> (i32, i32) {
    %c1_i32 = arith.constant 1 : i32
    %0 = arith.muli %arg0, %c1_i32 : i32
    %1 = arith.addi %0, %arg1 : i32
    %c0_i32 = arith.constant 0 : i32
    %2 = arith.minsi %1, %c0_i32 : i32
    %c0_i32_0 = arith.constant 0 : i32
    %c0_i32_1 = arith.constant 0 : i32
    return %2, %c0_i32_0 : i32, i32
  }
  func.func @transform_1(%arg0: i32, %arg1: i32) -> (i32, i32) {
    %c1_i32 = arith.constant 1 : i32
    %0 = arith.muli %arg0, %c1_i32 : i32
    %1 = arith.addi %0, %arg1 : i32
    %c0_i32 = arith.constant 0 : i32
    %2 = arith.minsi %1, %c0_i32 : i32
    %c0_i32_0 = arith.constant 0 : i32
    %c0_i32_1 = arith.constant 0 : i32
    return %2, %c0_i32_0 : i32, i32
  }
  func.func @transform_2(%arg0: i32, %arg1: i32) -> (i32, i32) {
    %c0_i32 = arith.constant 0 : i32
    %c0_i32_0 = arith.constant 0 : i32
    return %arg0, %c0_i32 : i32, i32
  }
  func.func @transform_3(%arg0: i32, %arg1: i32) -> (i32, i32) {
    %c0_i32 = arith.constant 0 : i32
    %c0_i32_0 = arith.constant 0 : i32
    return %arg0, %c0_i32 : i32, i32
  }
}

</mosaic_0001>

<llo_original>
// kernel: focal_loss.1
$region0: #{focal_loss.1}
  #allocation0 [shape = 'u32[]', space=smem, size = 0x4, offset = 0x4, fixed_abs, tag = 'smem constant byte address 0x4 - core index']
  #allocation1 [shape = 'u32[144,128]{1,0:T(1,128)}', space=vmem, size = 0x12000, scoped, tag = 'internal scratch']
  %s0 = inlined_call_operand.vmem [shape: f32[16,128], index: 0, kind: input, shape index: {}]
  %s1 = inlined_call_operand.vmem [shape: f32[16,128], index: 1, kind: input, shape index: {}]
  %s2 = inlined_call_operand.vmem [shape: f32[8,128], index: 2, kind: output, shape index: {0}]
  %s3 = inlined_call_operand.vmem [shape: f32[8,128], index: 3, kind: output, shape index: {1}]
  %4 = xla_tuple %s2, %s3
  %s5 = sld [smem:[#allocation0]]
  $region34: #{focal_loss.1} parent=0
    _
  %s7 = ssub.s32 1, %s5
  %s8 = scalar_select 0, %s7, %s5
  // Predicated region
  $region2: #{focal_loss.1} parent=0 // pred_check
    _
  $region3: #{focal_loss.1} parent=0 // pred_check_branch
    %10 = sbr.rel (0) target = $region5
  $region4: #{focal_loss.1} parent=0 // pred_region
    %s11 = sadd.s32 0, 0
    %p12 = scmp.lt.s32.totalorder %s11, 0
    %s13 = scalar_select %p12, %s11, 0
    %s14 = smul.u32 2, %s13
    %p15 = scmp.lt.s32.totalorder %s14, 1
    %s16 = scalar_select %p15, %s14, 1
    %s17 = smul.addr %s16, 8
    %s18 = scalar_lea.vmem %s0, %s17
    %s19 = sadd.s32 0, 0
    %p20 = scmp.lt.s32.totalorder %s19, 0
    %s21 = scalar_select %p20, %s19, 0
    %s22 = smul.u32 2, %s21
  $region5: #{focal_loss.1} parent=0 // pred_fallthru
    _
  // Predicated region
  $region6: #{focal_loss.1} parent=0 // pred_check
    _
  $region7: #{focal_loss.1} parent=0 // pred_check_branch
    %24 = sbr.rel (0) target = $region9
  $region8: #{focal_loss.1} parent=0 // pred_region
    %s25 = sadd.s32 0, 0
    %p26 = scmp.lt.s32.totalorder %s25, 0
    %s27 = scalar_select %p26, %s25, 0
    %s28 = smul.u32 2, %s27
    %p29 = scmp.lt.s32.totalorder %s28, 1
    %s30 = scalar_select %p29, %s28, 1
    %s31 = smul.addr %s30, 8
    %s32 = scalar_lea.vmem %s1, %s31
    %s33 = sadd.s32 0, 0
    %p34 = scmp.lt.s32.totalorder %s33, 0
    %s35 = scalar_select %p34, %s33, 0
    %s36 = smul.u32 2, %s35
  $region9: #{focal_loss.1} parent=0 // pred_fallthru
    _
  %s37 = sadd.s32 0, 0
  %p38 = scmp.lt.s32.totalorder %s37, 0
  %s39 = scalar_select %p38, %s37, 0
  %s40 = smul.u32 2, %s39
  %p41 = scmp.lt.s32.totalorder %s40, 1
  %s42 = scalar_select %p41, %s40, 1
  %s43 = smul.addr %s42, 8
  %s44 = scalar_lea.vmem %s0, %s43
  %s45 = sadd.s32 0, 0
  %p46 = scmp.lt.s32.totalorder %s45, 0
  %s47 = scalar_select %p46, %s45, 0
  %s48 = smul.u32 2, %s47
  %p49 = scmp.lt.s32.totalorder %s48, 1
  %s50 = scalar_select %p49, %s48, 1
  %s51 = smul.addr %s50, 8
  %s52 = scalar_lea.vmem %s1, %s51
  %s53 = sadd.s32 0, 0
  %p54 = scmp.lt.s32.totalorder %s53, 0
  %s55 = scalar_select %p54, %s53, 0
  %s56 = smul.u32 2, %s55
  %p57 = scmp.lt.s32.totalorder %s56, 1
  %s58 = scalar_select %p57, %s56, 1
  %s59 = smul.addr %s58, 8
  %s60 = scalar_lea.vmem %s0, %s59
  %s61 = sadd.s32 0, 0
  %p62 = scmp.lt.s32.totalorder %s61, 0
  %s63 = scalar_select %p62, %s61, 0
  %s64 = smul.u32 2, %s63
  %s65 = sadd.s32 0, 0
  %p66 = scmp.lt.s32.totalorder %s65, 0
  %s67 = scalar_select %p66, %s65, 0
  %s68 = smul.u32 2, %s67
  %p69 = scmp.lt.s32.totalorder %s68, 1
  %s70 = scalar_select %p69, %s68, 1
  %s71 = smul.addr %s70, 8
  %s72 = scalar_lea.vmem %s1, %s71
  %s73 = sadd.s32 0, 0
  %p74 = scmp.lt.s32.totalorder %s73, 0
  %s75 = scalar_select %p74, %s73, 0
  %s76 = smul.u32 2, %s75
  %p77 = scmp.eq.s32.totalorder 0, 0
  // Predicated region
  $region10: #{focal_loss.1} parent=0 // pred_check
    %p78 = pneg %p77
  $region11: #{focal_loss.1} parent=0 // pred_check_branch
    %80 = sbr.rel (%p78) target = $region13
  $region12: #{focal_loss.1} parent=0 // pred_region
    %81 = vst [vmem:[%s2] sm:$0xff] 0.0
    %82 = vst [vmem:[%s3] sm:$0xff] 0.0
  $region13: #{focal_loss.1} parent=0 // pred_fallthru
    _
  %s83 = sadd.s32 0, 0
  %p84 = scmp.lt.s32.totalorder %s83, 1
  // Predicated region
  $region14: #{focal_loss.1} parent=0 // pred_check
    %p85 = pneg %p84
  $region15: #{focal_loss.1} parent=0 // pred_check_branch
    %87 = sbr.rel (%p85) target = $region17
  $region16: #{focal_loss.1} parent=0 // pred_region
    %v88 = vld [vmem:[%s60] sm:$0xff]
    %v89 = vld [vmem:[%s60 + $0x8] sm:$0xff]
    %v90 = vld [vmem:[%s72] sm:$0xff]
    %v91 = vld [vmem:[%s72 + $0x8] sm:$0xff]
    %vm92 = vcmp.ne.f32.partialorder %v90, 255.0
    %vm93 = vcmp.ne.f32.partialorder %v91, 255.0
    %v94 = vmax.f32 %v88, 0.0
    %v95 = vmax.f32 %v89, 0.0
    %v96 = vmul.f32 %v88, %v90
    %v97 = vmul.f32 %v89, %v91
    %v98 = vsub.f32 %v94, %v96
    %v99 = vsub.f32 %v95, %v97
    %v100 = vand.u32 2147483647, %v88
    %v101 = vand.u32 2147483647, %v89
    %v102 = vsub.f32 0.0, %v100
    %v103 = vsub.f32 0.0, %v101
    %v104 = vmul.f32 %v102, 1.442695
    %v105 = vpow.pop %v104
    %v106 = vmul.f32 %v103, 1.442695
    %v107 = vpow.pop %v106
    %v108 = vadd.f32 %v105, 1.0
    %v109 = vlog2.pop %v108
    %v110 = vmul.f32 %v109, 0.6931472
    %v111 = vmul.f32 -0.5, %v105
    %v112 = vadd.f32 %v111, 1.0
    %v113 = vmul.f32 %v112, %v105
    %v114 = vand.u32 2147483647, %v105
    %vm115 = vcmp.lt.f32.partialorder %v114, 0.0004427343
    %v116 = vsel %vm115, %v113, %v110
    %v117 = vadd.f32 %v107, 1.0
    %v118 = vlog2.pop %v117
    %v119 = vmul.f32 %v118, 0.6931472
    %v120 = vmul.f32 -0.5, %v107
    %v121 = vadd.f32 %v120, 1.0
    %v122 = vmul.f32 %v121, %v107
    %v123 = vand.u32 2147483647, %v107
    %vm124 = vcmp.lt.f32.partialorder %v123, 0.0004427343
    %v125 = vsel %vm124, %v122, %v119
    %v126 = vadd.f32 %v98, %v116
    %v127 = vadd.f32 %v99, %v125
    %v128 = vsel %vm92, %v126, 0.0
    %v129 = vsel %vm93, %v127, 0.0
    %v130 = vsel %vm92, 1, 0
    %v131 = vsel %vm93, 1, 0
    %v132 = vcvt.s32.f32 %v130
    %v133 = vcvt.s32.f32 %v131
    %v134 = vld [vmem:[%s2] sm:$0xff]
    %v135 = vadd.f32 %v128, %v129
    %v136 = vadd.f32 %v134, %v135
    %137 = vst [vmem:[%s2] sm:$0xff] %v136
    %v138 = vld [vmem:[%s3] sm:$0xff]
    %v139 = vadd.f32 %v132, %v133
    %v140 = vadd.f32 %v138, %v139
    %141 = vst [vmem:[%s3] sm:$0xff] %v140
  $region17: #{focal_loss.1} parent=0 // pred_fallthru
    _
  // Predicated region
  $region18: #{focal_loss.1} parent=0 // pred_check
    _
  $region19: #{focal_loss.1} parent=0 // pred_check_branch
    %143 = sbr.rel (0) target = $region21
  $region20: #{focal_loss.1} parent=0 // pred_region
    _
  $region21: #{focal_loss.1} parent=0 // pred_fallthru
    _
  // Predicated region
  $region22: #{focal_loss.1} parent=0 // pred_check
    _
  $region23: #{focal_loss.1} parent=0 // pred_check_branch
    %145 = sbr.rel (0) target = $region25
  $region24: #{focal_loss.1} parent=0 // pred_region
    _
  $region25: #{focal_loss.1} parent=0 // pred_fallthru
    _
  // Predicated region
  $region26: #{focal_loss.1} parent=0 // pred_check
    _
  $region27: #{focal_loss.1} parent=0 // pred_check_branch
    %147 = sbr.rel (0) target = $region29
  $region28: #{focal_loss.1} parent=0 // pred_region
    _
  $region29: #{focal_loss.1} parent=0 // pred_fallthru
    _
  // Predicated region
  $region30: #{focal_loss.1} parent=0 // pred_check
    _
  $region31: #{focal_loss.1} parent=0 // pred_check_branch
    %149 = sbr.rel (0) target = $region33
  $region32: #{focal_loss.1} parent=0 // pred_region
    _
  $region33: #{focal_loss.1} parent=0 // pred_fallthru
    _

</llo_original>
